<compile_context>
chip_gen: v7x
topology: tpu7x:2x2x1
jax: 0.10.0
libtpu: 0.0.40
codegen_flags: <defaults>
</compile_context>

<pallas_src>
import functools

import jax
import jax.numpy as jnp
from jax import lax
from jax.experimental import pallas as pl
from jax.experimental.pallas import tpu as pltpu


# ------------------------------ helpers ------------------------------------- #

def _round_up(v, m):
    return ((v + m - 1) // m) * m


def _node_tile(n_pad):
    # 256-row tiles (matches v6e/v7x 256x256 MXU) when they divide, else 128.
    return 256 if n_pad % 256 == 0 else 128


def _pad2(a, rows, cols):
    return jnp.pad(a, ((0, rows - a.shape[0]), (0, cols - a.shape[1])))


# ------------------------------ kernels ------------------------------------- #

def _row_transform_kernel(*refs, pre_mask, post_mask, second_w):
    """Per row tile:
         h  = mask_replace(h, token)        (optional, encoder input masking)
         y  = h @ W1                        (GCN feature transform / e2d)
         y  = y * (1 - mask)                (optional, re-mask after e2d)
         y  = y @ W2                        (optional, fold decoder weight)
    """
    it = iter(refs)
    h_ref = next(it)                       # (TN, Din)  bf16
    if pre_mask:
        m_ref = next(it)                   # (TN, 1)    bf16 (0/1)
        tok_ref = next(it)                 # (1, Din)   bf16
    w1_ref = next(it)                      # (Din, D1)  bf16
    if post_mask:
        m2_ref = next(it)                  # (TN, 1)    f32 (0/1)
    if second_w:
        w2_ref = next(it)                  # (D1, D2)   bf16
    o_ref = next(it)                       # (TN, Dout)

    h = h_ref[...]
    if pre_mask:
        m = m_ref[...]
        h = h * (1.0 - m) + m * tok_ref[...]         # exact 0/1 select in bf16
    y = jnp.dot(h, w1_ref[...], preferred_element_type=jnp.float32)
    if post_mask:
        y = y * (1.0 - m2_ref[...])
    if second_w:
        y = jnp.dot(y.astype(jnp.bfloat16), w2_ref[...],
                    preferred_element_type=jnp.float32)
    o_ref[...] = y.astype(o_ref.dtype)


def row_transform(h, w1, *, pre_mask_vec=None, token=None,
                  post_mask_vec=None, w2=None, out_dtype=jnp.bfloat16):
    n_pad, din = h.shape
    d1 = w1.shape[1]
    dout = w2.shape[1] if w2 is not None else d1
    tn = _node_tile(n_pad)

    in_specs = [pl.BlockSpec((tn, din), lambda i: (i, 0))]
    args = [h.astype(jnp.bfloat16)]
    if pre_mask_vec is not None:
        in_specs += [pl.BlockSpec((tn, 1), lambda i: (i, 0)),
                     pl.BlockSpec((1, din), lambda i: (0, 0))]
        args += [pre_mask_vec.astype(jnp.bfloat16), token.astype(jnp.bfloat16)]
    in_specs += [pl.BlockSpec((din, d1), lambda i: (0, 0))]
    args += [w1.astype(jnp.bfloat16)]
    if post_mask_vec is not None:
        in_specs += [pl.BlockSpec((tn, 1), lambda i: (i, 0))]
        args += [post_mask_vec.astype(jnp.float32)]
    if w2 is not None:
        in_specs += [pl.BlockSpec((d1, dout), lambda i: (0, 0))]
        args += [w2.astype(jnp.bfloat16)]

    flops = 2 * n_pad * din * d1 + (2 * n_pad * d1 * dout if w2 is not None else 0)
    bytes_accessed = 2 * n_pad * (din + dout) + 2 * din * d1

    return pl.pallas_call(
        functools.partial(_row_transform_kernel,
                          pre_mask=pre_mask_vec is not None,
                          post_mask=post_mask_vec is not None,
                          second_w=w2 is not None),
        out_shape=jax.ShapeDtypeStruct((n_pad, dout), out_dtype),
        grid=(n_pad // tn,),
        in_specs=in_specs,
        out_specs=pl.BlockSpec((tn, dout), lambda i: (i, 0)),
        compiler_params=pltpu.CompilerParams(dimension_semantics=("parallel",)),
        cost_estimate=pl.CostEstimate(flops=int(flops), transcendentals=0,
                                      bytes_accessed=int(bytes_accessed)),
    )(*args)


def _spmm_kernel(*refs, apply_act, fuse_next):
    """K-tiled aggregation:  acc += A[i,k] @ HW[k]
       finalize (last k):    out = PReLU(acc + b) [@ W_next]
    """
    it = iter(refs)
    adj_ref = next(it)                            # (TN, TK)   bf16
    hw_ref = next(it)                             # (TK, Dmid) bf16
    b_ref = next(it)                              # (1, Dmid)  f32
    alpha_ref = next(it) if apply_act else None   # (1, 1)     f32 in SMEM
    nw_ref = next(it) if fuse_next else None      # (Dmid, Dout) bf16
    o_ref = next(it)                              # (TN, Dout)
    acc_ref = next(it)                            # (TN, Dmid) f32 scratch

    k = pl.program_id(1)

    @pl.when(k == 0)
    def _():
        acc_ref[...] = jnp.zeros_like(acc_ref)

    acc_ref[...] += jnp.dot(adj_ref[...], hw_ref[...],
                            preferred_element_type=jnp.float32)

    @pl.when(k == pl.num_programs(1) - 1)
    def _():
        out = acc_ref[...] + b_ref[...]
        if apply_act:
            a = alpha_ref[0, 0]                                   # PReLU
            out = jnp.maximum(out, 0.0) + a * jnp.minimum(out, 0.0)
        if fuse_next:
            out = jnp.dot(out.astype(jnp.bfloat16), nw_ref[...],
                          preferred_element_type=jnp.float32)
        o_ref[...] = out.astype(o_ref.dtype)


def spmm_finalize(adj, hw, b, alpha=None, *, apply_act, next_w=None,
                  out_dtype=jnp.bfloat16):
    n_pad = adj.shape[0]
    dmid = hw.shape[1]
    dout = next_w.shape[1] if next_w is not None else dmid
    tn = _node_tile(n_pad)
    tk = tn

    in_specs = [
        pl.BlockSpec((tn, tk), lambda i, k: (i, k)),       # adjacency tile
        pl.BlockSpec((tk, dmid), lambda i, k: (k, 0)),     # transformed rows
        pl.BlockSpec((1, dmid), lambda i, k: (0, 0)),      # bias row
    ]
    args = [adj.astype(jnp.bfloat16), hw.astype(jnp.bfloat16),
            b.astype(jnp.float32)]
    if apply_act:
        in_specs.append(pl.BlockSpec(memory_space=pltpu.MemorySpace.SMEM))
        args.append(alpha.astype(jnp.float32))             # PReLU slope
    if next_w is not None:
        in_specs.append(pl.BlockSpec((dmid, dout), lambda i, k: (0, 0)))
        args.append(next_w.astype(jnp.bfloat16))

    flops = 2 * n_pad * n_pad * dmid
    if next_w is not None:
        flops += 2 * n_pad * dmid * dout
    bytes_accessed = 2 * n_pad * n_pad + 2 * n_pad * dmid + 2 * dmid * dout \
        + n_pad * dout * jnp.dtype(out_dtype).itemsize

    return pl.pallas_call(
        functools.partial(_spmm_kernel, apply_act=apply_act,
                          fuse_next=next_w is not None),
        out_shape=jax.ShapeDtypeStruct((n_pad, dout), out_dtype),
        grid=(n_pad // tn, n_pad // tk),
        in_specs=in_specs,
        out_specs=pl.BlockSpec((tn, dout), lambda i, k: (i, 0)),
        scratch_shapes=[pltpu.VMEM((tn, dmid), jnp.float32)],
        compiler_params=pltpu.CompilerParams(
            dimension_semantics=("parallel", "arbitrary")),
        cost_estimate=pl.CostEstimate(flops=int(flops), transcendentals=0,
                                      bytes_accessed=int(bytes_accessed)),
    )(*args)


def _heads_kernel(h_ref, mw_ref, mb_ref, vw_ref, vb_ref, mean_ref, var_ref):
    # mean = F.normalize(h @ Wm + bm), var = F.normalize(h @ Wv + bv); fused.
    h = h_ref[...]
    mean = jnp.dot(h, mw_ref[...], preferred_element_type=jnp.float32) + mb_ref[...]
    var = jnp.dot(h, vw_ref[...], preferred_element_type=jnp.float32) + vb_ref[...]
    inv_m = lax.rsqrt(jnp.maximum(jnp.sum(mean * mean, axis=-1, keepdims=True), 1e-24))
    inv_v = lax.rsqrt(jnp.maximum(jnp.sum(var * var, axis=-1, keepdims=True), 1e-24))
    mean_ref[...] = mean * inv_m
    var_ref[...] = var * inv_v


def mean_var_heads(h, mw, mb, vw, vb):
    n_pad, hid = h.shape
    tn = _node_tile(n_pad)
    return pl.pallas_call(
        _heads_kernel,
        out_shape=(jax.ShapeDtypeStruct((n_pad, hid), jnp.float32),
                   jax.ShapeDtypeStruct((n_pad, hid), jnp.float32)),
        grid=(n_pad // tn,),
        in_specs=[
            pl.BlockSpec((tn, hid), lambda i: (i, 0)),
            pl.BlockSpec((hid, hid), lambda i: (0, 0)),
            pl.BlockSpec((1, hid), lambda i: (0, 0)),
            pl.BlockSpec((hid, hid), lambda i: (0, 0)),
            pl.BlockSpec((1, hid), lambda i: (0, 0)),
        ],
        out_specs=(pl.BlockSpec((tn, hid), lambda i: (i, 0)),
                   pl.BlockSpec((tn, hid), lambda i: (i, 0))),
        compiler_params=pltpu.CompilerParams(dimension_semantics=("parallel",)),
        cost_estimate=pl.CostEstimate(flops=4 * n_pad * hid * hid,
                                      transcendentals=2 * n_pad,
                                      bytes_accessed=2 * n_pad * hid
                                      + 4 * hid * hid + 8 * n_pad * hid),
    )(h.astype(jnp.bfloat16), mw.astype(jnp.bfloat16), mb.astype(jnp.float32),
      vw.astype(jnp.bfloat16), vb.astype(jnp.float32))


# --------------------------- parameters (synthetic) -------------------------- #

def init_params(key, in_dim, num_hidden, num_layers):
    keys = jax.random.split(key, num_layers + 4)

    def w(k, shape):
        return 0.1 * jax.random.normal(k, shape, jnp.float32)

    encoder = []
    din = in_dim
    for li in range(num_layers):
        encoder.append({
            "w": w(keys[li], (din, num_hidden)),
            "b": jnp.zeros((1, num_hidden), jnp.float32),
            "alpha": jnp.full((1, 1), 0.25, jnp.float32),   # PReLU slope
        })
        din = num_hidden

    return {
        "encoder": encoder,                                          # GCN x num_layers
        "enc_mask_token": jnp.zeros((1, in_dim), jnp.float32),       # nn.Parameter(zeros(1,in_dim))
        "mean_w": w(keys[num_layers + 0], (num_hidden, num_hidden)),
        "mean_b": jnp.zeros((1, num_hidden), jnp.float32),
        "var_w": w(keys[num_layers + 1], (num_hidden, num_hidden)),
        "var_b": jnp.zeros((1, num_hidden), jnp.float32),
        "e2d_w": w(keys[num_layers + 2], (num_hidden, num_hidden)),  # no bias
        "dec_w": w(keys[num_layers + 3], (num_hidden, in_dim)),      # decoder: 1-layer GCN
        "dec_b": jnp.zeros((1, in_dim), jnp.float32),
    }


# ------------------------------ forward -------------------------------------- #

def premodel_forward(params, adj_norm, x, mask_rate, mask_key):
    """mask_attr_prediction: returns (recon (== g.ndata['attr']), mask_nodes, mean, var)."""
    N, in_dim = x.shape
    num_hidden = params["e2d_w"].shape[0]
    num_layers = len(params["encoder"])

    # padded sizes: lane-dense feature dims, MXU-friendly node tiles
    d_in = _round_up(in_dim, 128)
    d_h = _round_up(num_hidden, 128)
    n_pad = _round_up(N, 128)

    # encoding_mask_noise (replace_rate = 0): permute, mask first mask_rate*N nodes
    num_mask = int(mask_rate * N)
    perm = jax.random.permutation(mask_key, N)
    mask_nodes = perm[:num_mask]
    mask_vec = jnp.zeros((n_pad, 1), jnp.float32).at[mask_nodes, 0].set(1.0)
    # TODO(synk): mask_vec scatter could move in-kernel via scalar prefetch for very large N.

    x_pad = _pad2(x, n_pad, d_in)
    adj_pad = _pad2(adj_norm, n_pad, n_pad).astype(jnp.bfloat16)
    token = _pad2(params["enc_mask_token"], 1, d_in)
    enc = params["encoder"]

    # Encoder (GCN x num_layers, PReLU).  Feature transform of layer 0 folds the
    # input masking; each aggregation kernel fuses the *next* layer's weight
    # multiply into its finalize so hidden activations never hit HBM twice.
    # TODO(synk): when out_dim >> in_dim an aggregate-first ordering would be cheaper.
    hw = row_transform(x_pad, _pad2(enc[0]["w"], d_in, d_h),
                       pre_mask_vec=mask_vec, token=token)
    for li in range(num_layers):
        layer = enc[li]
        next_w = _pad2(enc[li + 1]["w"], d_h, d_h) if li + 1 < num_layers else None
        hw = spmm_finalize(adj_pad, hw, _pad2(layer["b"], 1, d_h), layer["alpha"],
                           apply_act=True, next_w=next_w, out_dtype=jnp.bfloat16)
    enc_rep = hw  # (n_pad, d_h), concat_hidden = False

    # mean / var heads + F.normalize(dim=-1), fused in one kernel
    mean_pad, var_pad = mean_var_heads(
        enc_rep,
        _pad2(params["mean_w"], d_h, d_h), _pad2(params["mean_b"], 1, d_h),
        _pad2(params["var_w"], d_h, d_h), _pad2(params["var_b"], 1, d_h))

    # encoder_to_decoder (no bias) + re-mask (decoder != 'mlp'/'linear') + decoder
    # feature transform fused in one kernel; `rep` is never materialized.
    hw_dec = row_transform(enc_rep, _pad2(params["e2d_w"], d_h, d_h),
                           post_mask_vec=mask_vec,
                           w2=_pad2(params["dec_w"], d_h, d_in))

    # decoder aggregation: single GCN layer back to in_dim, no activation
    recon_pad = spmm_finalize(adj_pad, hw_dec, _pad2(params["dec_b"], 1, d_in),
                              None, apply_act=False, out_dtype=jnp.float32)

    recon = recon_pad[:N, :in_dim]
    mean = mean_pad[:N, :num_hidden]
    var = var_pad[:N, :num_hidden]
    return recon, mask_nodes, mean, var


# -------------------------------- main ---------------------------------------- #

if __name__ == "__main__":
    N, in_dim, num_hidden, num_layers = 16, 32, 32, 2
    mask_rate = 0.3

    key = jax.random.PRNGKey(0)
    k_feat, k_param, k_mask = jax.random.split(key, 3)

    # node features g.ndata['attr']
    x = jax.random.normal(k_feat, (N, in_dim), jnp.float32)

    # deterministic graph: ring + self loops, symmetric normalization D^-1/2 A D^-1/2
    idx = jnp.arange(N)
    A = jnp.eye(N, dtype=jnp.float32)
    A = A.at[idx, (idx + 1) % N].set(1.0)
    A = A.at[(idx + 1) % N, idx].set(1.0)
    deg = A.sum(axis=1)
    dinv = 1.0 / jnp.sqrt(deg)
    adj_norm = (A * dinv[:, None]) * dinv[None, :]

    params = init_params(k_param, in_dim, num_hidden, num_layers)

    recon, mask_nodes, mean, var = premodel_forward(params, adj_norm, x, mask_rate, k_mask)
    jax.block_until_ready((recon, mask_nodes, mean, var))

    assert recon.shape == (N, in_dim)
    assert mean.shape == (N, num_hidden) and var.shape == (N, num_hidden)
    assert mask_nodes.shape == (int(mask_rate * N),)
    assert bool(jnp.all(jnp.isfinite(recon))) and bool(jnp.all(jnp.isfinite(mean)))
    print("KERNEL_OK")
</pallas_src>

<mosaic_0001>
module attributes {stable_mosaic.version = 11 : i64} {
  func.func @_row_transform_kernel(%arg0: i32, %arg1: memref<128x128xbf16, #tpu.memory_space<vmem>>, %arg2: memref<128x1xbf16, #tpu.memory_space<vmem>>, %arg3: memref<1x128xbf16, #tpu.memory_space<vmem>>, %arg4: memref<128x128xbf16, #tpu.memory_space<vmem>>, %arg5: memref<128x128xbf16, #tpu.memory_space<vmem>>) attributes {dimension_semantics = [#tpu.dimension_semantics<parallel>], iteration_bounds = array<i64: 1>, scalar_prefetch = 0 : i64, scratch_operands = 0 : i64, tpu.core_type = #tpu.core_type<tc>, window_params = [{transform_indices = @transform_0, window_bounds = array<i64: 128, 128>}, {transform_indices = @transform_1, window_bounds = array<i64: 128, 1>}, {pipeline_mode = #tpu.pipeline_mode<synchronous>, transform_indices = @transform_2, window_bounds = array<i64: 1, 128>}, {pipeline_mode = #tpu.pipeline_mode<synchronous>, transform_indices = @transform_3, window_bounds = array<i64: 128, 128>}, {transform_indices = @transform_4, window_bounds = array<i64: 128, 128>}]} {
    %c0 = arith.constant 0 : index
    %c0_0 = arith.constant 0 : index
    %0 = vector.load %arg1[%c0, %c0_0] : memref<128x128xbf16, #tpu.memory_space<vmem>>, vector<128x128xbf16>
    %c0_1 = arith.constant 0 : index
    %c0_2 = arith.constant 0 : index
    %1 = vector.load %arg2[%c0_1, %c0_2] : memref<128x1xbf16, #tpu.memory_space<vmem>>, vector<128x1xbf16>
    %cst = arith.constant 1.000000e+00 : bf16
    %2 = vector.broadcast %cst : bf16 to vector<128x1xbf16>
    %3 = arith.subf %2, %1 : vector<128x1xbf16>
    %4 = vector.broadcast %3 : vector<128x1xbf16> to vector<128x128xbf16>
    %5 = arith.mulf %0, %4 : vector<128x128xbf16>
    %c0_3 = arith.constant 0 : index
    %c0_4 = arith.constant 0 : index
    %6 = vector.load %arg3[%c0_3, %c0_4] : memref<1x128xbf16, #tpu.memory_space<vmem>>, vector<1x128xbf16>
    %7 = vector.broadcast %1 : vector<128x1xbf16> to vector<128x128xbf16>
    %8 = vector.broadcast %6 : vector<1x128xbf16> to vector<128x128xbf16>
    %9 = arith.mulf %7, %8 : vector<128x128xbf16>
    %10 = arith.addf %5, %9 : vector<128x128xbf16>
    %c0_5 = arith.constant 0 : index
    %c0_6 = arith.constant 0 : index
    %11 = vector.load %arg4[%c0_5, %c0_6] : memref<128x128xbf16, #tpu.memory_space<vmem>>, vector<128x128xbf16>
    %cst_7 = arith.constant dense<0.000000e+00> : vector<128x128xf32>
    %12 = tpu.matmul %10, %11, %cst_7 {dimension_numbers = #tpu.dot_dimension_numbers<[1], [0], [0], [1], [0, 0, 1, 1], [], []>} : vector<128x128xbf16>, vector<128x128xbf16>, vector<128x128xf32> -> vector<128x128xf32>
    %13 = arith.truncf %12 : vector<128x128xf32> to vector<128x128xbf16>
    %c0_8 = arith.constant 0 : index
    %c0_9 = arith.constant 0 : index
    %14 = vector.load %arg5[%c0_8, %c0_9] : memref<128x128xbf16, #tpu.memory_space<vmem>>, vector<128x128xbf16>
    tpu.vector_store %arg5[%c0_8, %c0_9], %13 {strides = array<i32>} : memref<128x128xbf16, #tpu.memory_space<vmem>>, vector<128x128xbf16>,
    return
  }
  func.func @transform_0(%arg0: i32) -> (i32, i32) {
    %c0_i32 = arith.constant 0 : i32
    %c0_i32_0 = arith.constant 0 : i32
    return %arg0, %c0_i32 : i32, i32
  }
  func.func @transform_1(%arg0: i32) -> (i32, i32) {
    %c0_i32 = arith.constant 0 : i32
    %c0_i32_0 = arith.constant 0 : i32
    return %arg0, %c0_i32 : i32, i32
  }
  func.func @transform_2(%arg0: i32) -> (i32, i32) {
    %c0_i32 = arith.constant 0 : i32
    %c0_i32_0 = arith.constant 0 : i32
    %c0_i32_1 = arith.constant 0 : i32
    return %c0_i32, %c0_i32_0 : i32, i32
  }
  func.func @transform_3(%arg0: i32) -> (i32, i32) {
    %c0_i32 = arith.constant 0 : i32
    %c0_i32_0 = arith.constant 0 : i32
    %c0_i32_1 = arith.constant 0 : i32
    return %c0_i32, %c0_i32_0 : i32, i32
  }
  func.func @transform_4(%arg0: i32) -> (i32, i32) {
    %c0_i32 = arith.constant 0 : i32
    %c0_i32_0 = arith.constant 0 : i32
    return %arg0, %c0_i32 : i32, i32
  }
}

</mosaic_0001>

<llo_original>
// kernel: tpu_custom_call.1
$region0: #{tpu_custom_call.1}
  #allocation0 [shape = 'u32[]', space=smem, size = 0x4, offset = 0x4, fixed_abs, tag = 'smem constant byte address 0x4 - core index']
  #allocation1 [shape = 'u32[144,128]{1,0:T(1,128)}', space=vmem, size = 0x12000, scoped, tag = 'internal scratch']
  %s0 = inlined_call_operand.vmem [shape: bf16[128,128], index: 0, kind: input, shape index: {}]
  %s1 = inlined_call_operand.vmem [shape: bf16[128,1], index: 1, kind: input, shape index: {}]
  %s2 = inlined_call_operand.vmem [shape: bf16[1,128], index: 2, kind: input, shape index: {}]
  %s3 = inlined_call_operand.hbm [shape: bf16[128,128], index: 3, kind: input, shape index: {}]
  %s4 = inlined_call_operand.hbm [shape: bf16[128,128], index: 4, kind: output, shape index: {}]
  %s5 = sld [smem:[#allocation0]]
  $region30: #{tpu_custom_call.1} parent=0
    _
  %s7 = ssub.s32 1, %s5
  %s8 = scalar_select 0, %s7, %s5
  $region1: #{tpu_custom_call.1} parent=0
    #allocation2 [shape = 'u8[32768]{0}', space=vmem, size = 0x8000, scoped, tag = 'input window, operand 3, single buffered']
    #allocation3 [shape = 's32[1]{0}', space=sflag, size = 0x4, scoped, tag = 'scoped memory for tpu_custom_call.1']
    #allocation4 [shape = 's32[1]{0}', space=sflag, size = 0x4, scoped, tag = 'scoped memory for tpu_custom_call.1']
    #allocation5 [shape = 'u8[32768]{0}', space=vmem, size = 0x8000, scoped, tag = 'output window, operand 0, single buffered']
    %9 = vsyncpa [#allocation3], 0
    %10 = vsyncpa [#allocation4], 0
    // Predicated region
    $region2: #{tpu_custom_call.1} parent=1 // pred_check
      _
    $region3: #{tpu_custom_call.1} parent=1 // pred_check_branch
      %12 = sbr.rel (0) target = $region5
    $region4: #{tpu_custom_call.1} parent=1 // pred_region
      _
    $region5: #{tpu_custom_call.1} parent=1 // pred_fallthru
      _
    // Predicated region
    $region6: #{tpu_custom_call.1} parent=1 // pred_check
      _
    $region7: #{tpu_custom_call.1} parent=1 // pred_check_branch
      %14 = sbr.rel (0) target = $region9
    $region8: #{tpu_custom_call.1} parent=1 // pred_region
      _
    $region9: #{tpu_custom_call.1} parent=1 // pred_fallthru
      _
    // Predicated region
    $region10: #{tpu_custom_call.1} parent=1 // pred_check
      _
    $region11: #{tpu_custom_call.1} parent=1 // pred_check_branch
      %16 = sbr.rel (0) target = $region13
    $region12: #{tpu_custom_call.1} parent=1 // pred_region
      _
    $region13: #{tpu_custom_call.1} parent=1 // pred_fallthru
      _
    // Predicated region
    $region14: #{tpu_custom_call.1} parent=1 // pred_check
      _
    $region15: #{tpu_custom_call.1} parent=1 // pred_check_branch
      %18 = sbr.rel (0) target = $region17
    $region16: #{tpu_custom_call.1} parent=1 // pred_region
      %s20 = ssub.s32 1024, 1024
      %21 = vsyncadd [#allocation3], %s20
      %s22 = sshll.u32 [#allocation2], 4
      %s23 = int_to_ptr.vmem [resolvable:$true] %s22
      %28 = dma.hbm_to_vmem [thread:$0]  %s3, 1024, %s23, [#allocation3], 64, 64, 4
    $region17: #{tpu_custom_call.1} parent=1 // pred_fallthru
      _
    // Predicated region
    $region18: #{tpu_custom_call.1} parent=1 // pred_check
      _
    $region19: #{tpu_custom_call.1} parent=1 // pred_check_branch
      %30 = sbr.rel (0) target = $region21
    $region20: #{tpu_custom_call.1} parent=1 // pred_region
      %31 = dma.done [#allocation3], 1024
    $region21: #{tpu_custom_call.1} parent=1 // pred_fallthru
      _
    %v34 = vld [vmem:[%s0] sm:$0xf]
    %v35 = vld [vmem:[%s0 + $0x4] sm:$0xf]
    %v36 = vld [vmem:[%s0 + $0x8] sm:$0xf]
    %v37 = vld [vmem:[%s0 + $0xc] sm:$0xf]
    %v38 = vld [vmem:[%s0 + $0x10] sm:$0xf]
    %v39 = vld [vmem:[%s0 + $0x14] sm:$0xf]
    %v40 = vld [vmem:[%s0 + $0x18] sm:$0xf]
    %v41 = vld [vmem:[%s0 + $0x1c] sm:$0xf]
    %v42 = vld [vmem:[%s0 + $0x20] sm:$0xf]
    %v43 = vld [vmem:[%s0 + $0x24] sm:$0xf]
    %v44 = vld [vmem:[%s0 + $0x28] sm:$0xf]
    %v45 = vld [vmem:[%s0 + $0x2c] sm:$0xf]
    %v46 = vld [vmem:[%s0 + $0x30] sm:$0xf]
    %v47 = vld [vmem:[%s0 + $0x34] sm:$0xf]
    %v48 = vld [vmem:[%s0 + $0x38] sm:$0xf]
    %v49 = vld [vmem:[%s0 + $0x3c] sm:$0xf]
    %v50 = vld [vmem:[%s1] sm:$0xf]
    %v51 = vld [vmem:[%s1 + $0x4] sm:$0xf]
    %v52 = vld [vmem:[%s1 + $0x8] sm:$0xf]
    %v53 = vld [vmem:[%s1 + $0xc] sm:$0xf]
    %v54 = vld [vmem:[%s1 + $0x10] sm:$0xf]
    %v55 = vld [vmem:[%s1 + $0x14] sm:$0xf]
    %v56 = vld [vmem:[%s1 + $0x18] sm:$0xf]
    %v57 = vld [vmem:[%s1 + $0x1c] sm:$0xf]
    %v58 = vld [vmem:[%s1 + $0x20] sm:$0xf]
    %v59 = vld [vmem:[%s1 + $0x24] sm:$0xf]
    %v60 = vld [vmem:[%s1 + $0x28] sm:$0xf]
    %v61 = vld [vmem:[%s1 + $0x2c] sm:$0xf]
    %v62 = vld [vmem:[%s1 + $0x30] sm:$0xf]
    %v63 = vld [vmem:[%s1 + $0x34] sm:$0xf]
    %v64 = vld [vmem:[%s1 + $0x38] sm:$0xf]
    %v65 = vld [vmem:[%s1 + $0x3c] sm:$0xf]
    %v66 = vsub.bf16 1065369472, %v50
    %v67 = vsub.bf16 1065369472, %v51
    %v68 = vsub.bf16 1065369472, %v52
    %v69 = vsub.bf16 1065369472, %v53
    %v70 = vsub.bf16 1065369472, %v54
    %v71 = vsub.bf16 1065369472, %v55
    %v72 = vsub.bf16 1065369472, %v56
    %v73 = vsub.bf16 1065369472, %v57
    %v74 = vsub.bf16 1065369472, %v58
    %v75 = vsub.bf16 1065369472, %v59
    %v76 = vsub.bf16 1065369472, %v60
    %v77 = vsub.bf16 1065369472, %v61
    %v78 = vsub.bf16 1065369472, %v62
    %v79 = vsub.bf16 1065369472, %v63
    %v80 = vsub.bf16 1065369472, %v64
    %v81 = vsub.bf16 1065369472, %v65
    %83 = vset.pattern.permute.xlu0 0
    %84 = vperm.xlu0 %83, %v66
    %v85 = vpop.permute.xlu0 %84
    %v88 = vunpack.c.l.s4 839922192
    %v89 = vunpack.c.0.s8 %v88
    %v90 = vlaneseq
    %v91 = vshrl.u32 %v90, 7
    %v92 = vsub.s32 %v89, %v91
    %v93 = vrot.slane %v85, %v92
    %95 = vset.pattern.permute.xlu0 0
    %96 = vperm.xlu0 %95, %v67
    %v97 = vpop.permute.xlu0 %96
    %v100 = vunpack.c.l.s4 839922192
    %v101 = vunpack.c.0.s8 %v100
    %v102 = vlaneseq
    %v103 = vshrl.u32 %v102, 7
    %v104 = vsub.s32 %v101, %v103
    %v105 = vrot.slane %v97, %v104
    %107 = vset.pattern.permute.xlu0 0
    %108 = vperm.xlu0 %107, %v68
    %v109 = vpop.permute.xlu0 %108
    %v112 = vunpack.c.l.s4 839922192
    %v113 = vunpack.c.0.s8 %v112
    %v114 = vlaneseq
    %v115 = vshrl.u32 %v114, 7
    %v116 = vsub.s32 %v113, %v115
    %v117 = vrot.slane %v109, %v116
    %119 = vset.pattern.permute.xlu0 0
    %120 = vperm.xlu0 %119, %v69
    %v121 = vpop.permute.xlu0 %120
    %v124 = vunpack.c.l.s4 839922192
    %v125 = vunpack.c.0.s8 %v124
    %v126 = vlaneseq
    %v127 = vshrl.u32 %v126, 7
    %v128 = vsub.s32 %v125, %v127
    %v129 = vrot.slane %v121, %v128
    %131 = vset.pattern.permute.xlu0 0
    %132 = vperm.xlu0 %131, %v70
    %v133 = vpop.permute.xlu0 %132
    %v136 = vunpack.c.l.s4 839922192
    %v137 = vunpack.c.0.s8 %v136
    %v138 = vlaneseq
    %v139 = vshrl.u32 %v138, 7
    %v140 = vsub.s32 %v137, %v139
    %v141 = vrot.slane %v133, %v140
    %143 = vset.pattern.permute.xlu0 0
    %144 = vperm.xlu0 %143, %v71
    %v145 = vpop.permute.xlu0 %144
    %v148 = vunpack.c.l.s4 839922192
    %v149 = vunpack.c.0.s8 %v148
    %v150 = vlaneseq
    %v151 = vshrl.u32 %v150, 7
    %v152 = vsub.s32 %v149, %v151
    %v153 = vrot.slane %v145, %v152
    %155 = vset.pattern.permute.xlu0 0
    %156 = vperm.xlu0 %155, %v72
    %v157 = vpop.permute.xlu0 %156
    %v160 = vunpack.c.l.s4 839922192
    %v161 = vunpack.c.0.s8 %v160
    %v162 = vlaneseq
    %v163 = vshrl.u32 %v162, 7
    %v164 = vsub.s32 %v161, %v163
    %v165 = vrot.slane %v157, %v164
    %167 = vset.pattern.permute.xlu0 0
    %168 = vperm.xlu0 %167, %v73
    %v169 = vpop.permute.xlu0 %168
    %v172 = vunpack.c.l.s4 839922192
    %v173 = vunpack.c.0.s8 %v172
    %v174 = vlaneseq
    %v175 = vshrl.u32 %v174, 7
    %v176 = vsub.s32 %v173, %v175
    %v177 = vrot.slane %v169, %v176
    %179 = vset.pattern.permute.xlu0 0
    %180 = vperm.xlu0 %179, %v74
    %v181 = vpop.permute.xlu0 %180
    %v184 = vunpack.c.l.s4 839922192
    %v185 = vunpack.c.0.s8 %v184
    %v186 = vlaneseq
    %v187 = vshrl.u32 %v186, 7
    %v188 = vsub.s32 %v185, %v187
    %v189 = vrot.slane %v181, %v188
    %191 = vset.pattern.permute.xlu0 0
    %192 = vperm.xlu0 %191, %v75
    %v193 = vpop.permute.xlu0 %192
    %v196 = vunpack.c.l.s4 839922192
    %v197 = vunpack.c.0.s8 %v196
    %v198 = vlaneseq
    %v199 = vshrl.u32 %v198, 7
    %v200 = vsub.s32 %v197, %v199
    %v201 = vrot.slane %v193, %v200
    %203 = vset.pattern.permute.xlu0 0
    %204 = vperm.xlu0 %203, %v76
    %v205 = vpop.permute.xlu0 %204
    %v208 = vunpack.c.l.s4 839922192
    %v209 = vunpack.c.0.s8 %v208
    %v210 = vlaneseq
    %v211 = vshrl.u32 %v210, 7
    %v212 = vsub.s32 %v209, %v211
    %v213 = vrot.slane %v205, %v212
    %215 = vset.pattern.permute.xlu0 0
    %216 = vperm.xlu0 %215, %v77
    %v217 = vpop.permute.xlu0 %216
    %v220 = vunpack.c.l.s4 839922192
    %v221 = vunpack.c.0.s8 %v220
    %v222 = vlaneseq
    %v223 = vshrl.u32 %v222, 7
    %v224 = vsub.s32 %v221, %v223
    %v225 = vrot.slane %v217, %v224
    %227 = vset.pattern.permute.xlu0 0
    %228 = vperm.xlu0 %227, %v78
    %v229 = vpop.permute.xlu0 %228
    %v232 = vunpack.c.l.s4 839922192
    %v233 = vunpack.c.0.s8 %v232
    %v234 = vlaneseq
    %v235 = vshrl.u32 %v234, 7
    %v236 = vsub.s32 %v233, %v235
    %v237 = vrot.slane %v229, %v236
    %239 = vset.pattern.permute.xlu0 0
    %240 = vperm.xlu0 %239, %v79
    %v241 = vpop.permute.xlu0 %240
    %v244 = vunpack.c.l.s4 839922192
    %v245 = vunpack.c.0.s8 %v244
    %v246 = vlaneseq
    %v247 = vshrl.u32 %v246, 7
    %v248 = vsub.s32 %v245, %v247
    %v249 = vrot.slane %v241, %v248
    %251 = vset.pattern.permute.xlu0 0
    %252 = vperm.xlu0 %251, %v80
    %v253 = vpop.permute.xlu0 %252
    %v256 = vunpack.c.l.s4 839922192
    %v257 = vunpack.c.0.s8 %v256
    %v258 = vlaneseq
    %v259 = vshrl.u32 %v258, 7
    %v260 = vsub.s32 %v257, %v259
    %v261 = vrot.slane %v253, %v260
    %263 = vset.pattern.permute.xlu0 0
    %264 = vperm.xlu0 %263, %v81
    %v265 = vpop.permute.xlu0 %264
    %v268 = vunpack.c.l.s4 839922192
    %v269 = vunpack.c.0.s8 %v268
    %v270 = vlaneseq
    %v271 = vshrl.u32 %v270, 7
    %v272 = vsub.s32 %v269, %v271
    %v273 = vrot.slane %v265, %v272
    %v274 = vmul.bf16 %v34, %v93
    %v275 = vmul.bf16 %v35, %v105
    %v276 = vmul.bf16 %v36, %v117
    %v277 = vmul.bf16 %v37, %v129
    %v278 = vmul.bf16 %v38, %v141
    %v279 = vmul.bf16 %v39, %v153
    %v280 = vmul.bf16 %v40, %v165
    %v281 = vmul.bf16 %v41, %v177
    %v282 = vmul.bf16 %v42, %v189
    %v283 = vmul.bf16 %v43, %v201
    %v284 = vmul.bf16 %v44, %v213
    %v285 = vmul.bf16 %v45, %v225
    %v286 = vmul.bf16 %v46, %v237
    %v287 = vmul.bf16 %v47, %v249
    %v288 = vmul.bf16 %v48, %v261
    %v289 = vmul.bf16 %v49, %v273
    %v290 = vld [vmem:[%s2] sm:$0x1]
    %292 = vset.pattern.permute.xlu0 0
    %293 = vperm.xlu0 %292, %v50
    %v294 = vpop.permute.xlu0 %293
    %v297 = vunpack.c.l.s4 839922192
    %v298 = vunpack.c.0.s8 %v297
    %v299 = vlaneseq
    %v300 = vshrl.u32 %v299, 7
    %v301 = vsub.s32 %v298, %v300
    %v302 = vrot.slane %v294, %v301
    %304 = vset.pattern.permute.xlu0 0
    %305 = vperm.xlu0 %304, %v51
    %v306 = vpop.permute.xlu0 %305
    %v309 = vunpack.c.l.s4 839922192
    %v310 = vunpack.c.0.s8 %v309
    %v311 = vlaneseq
    %v312 = vshrl.u32 %v311, 7
    %v313 = vsub.s32 %v310, %v312
    %v314 = vrot.slane %v306, %v313
    %316 = vset.pattern.permute.xlu0 0
    %317 = vperm.xlu0 %316, %v52
    %v318 = vpop.permute.xlu0 %317
    %v321 = vunpack.c.l.s4 839922192
    %v322 = vunpack.c.0.s8 %v321
    %v323 = vlaneseq
    %v324 = vshrl.u32 %v323, 7
    %v325 = vsub.s32 %v322, %v324
    %v326 = vrot.slane %v318, %v325
    %328 = vset.pattern.permute.xlu0 0
    %329 = vperm.xlu0 %328, %v53
    %v330 = vpop.permute.xlu0 %329
    %v333 = vunpack.c.l.s4 839922192
    %v334 = vunpack.c.0.s8 %v333
    %v335 = vlaneseq
    %v336 = vshrl.u32 %v335, 7
    %v337 = vsub.s32 %v334, %v336
    %v338 = vrot.slane %v330, %v337
    %340 = vset.pattern.permute.xlu0 0
    %341 = vperm.xlu0 %340, %v54
    %v342 = vpop.permute.xlu0 %341
    %v345 = vunpack.c.l.s4 839922192
    %v346 = vunpack.c.0.s8 %v345
    %v347 = vlaneseq
    %v348 = vshrl.u32 %v347, 7
    %v349 = vsub.s32 %v346, %v348
    %v350 = vrot.slane %v342, %v349
    %352 = vset.pattern.permute.xlu0 0
    %353 = vperm.xlu0 %352, %v55
    %v354 = vpop.permute.xlu0 %353
    %v357 = vunpack.c.l.s4 839922192
    %v358 = vunpack.c.0.s8 %v357
    %v359 = vlaneseq
    %v360 = vshrl.u32 %v359, 7
    %v361 = vsub.s32 %v358, %v360
    %v362 = vrot.slane %v354, %v361
    %364 = vset.pattern.permute.xlu0 0
    %365 = vperm.xlu0 %364, %v56
    %v366 = vpop.permute.xlu0 %365
    %v369 = vunpack.c.l.s4 839922192
    %v370 = vunpack.c.0.s8 %v369
    %v371 = vlaneseq
    %v372 = vshrl.u32 %v371, 7
    %v373 = vsub.s32 %v370, %v372
    %v374 = vrot.slane %v366, %v373
    %376 = vset.pattern.permute.xlu0 0
    %377 = vperm.xlu0 %376, %v57
    %v378 = vpop.permute.xlu0 %377
    %v381 = vunpack.c.l.s4 839922192
    %v382 = vunpack.c.0.s8 %v381
    %v383 = vlaneseq
    %v384 = vshrl.u32 %v383, 7
    %v385 = vsub.s32 %v382, %v384
    %v386 = vrot.slane %v378, %v385
    %388 = vset.pattern.permute.xlu0 0
    %389 = vperm.xlu0 %388, %v58
    %v390 = vpop.permute.xlu0 %389
    %v393 = vunpack.c.l.s4 839922192
    %v394 = vunpack.c.0.s8 %v393
    %v395 = vlaneseq
    %v396 = vshrl.u32 %v395, 7
    %v397 = vsub.s32 %v394, %v396
    %v398 = vrot.slane %v390, %v397
    %400 = vset.pattern.permute.xlu0 0
    %401 = vperm.xlu0 %400, %v59
    %v402 = vpop.permute.xlu0 %401
    %v405 = vunpack.c.l.s4 839922192
    %v406 = vunpack.c.0.s8 %v405
    %v407 = vlaneseq
    %v408 = vshrl.u32 %v407, 7
    %v409 = vsub.s32 %v406, %v408
    %v410 = vrot.slane %v402, %v409
    %412 = vset.pattern.permute.xlu0 0
    %413 = vperm.xlu0 %412, %v60
    %v414 = vpop.permute.xlu0 %413
    %v417 = vunpack.c.l.s4 839922192
    %v418 = vunpack.c.0.s8 %v417
    %v419 = vlaneseq
    %v420 = vshrl.u32 %v419, 7
    %v421 = vsub.s32 %v418, %v420
    %v422 = vrot.slane %v414, %v421
    %424 = vset.pattern.permute.xlu0 0
    %425 = vperm.xlu0 %424, %v61
    %v426 = vpop.permute.xlu0 %425
    %v429 = vunpack.c.l.s4 839922192
    %v430 = vunpack.c.0.s8 %v429
    %v431 = vlaneseq
    %v432 = vshrl.u32 %v431, 7
    %v433 = vsub.s32 %v430, %v432
    %v434 = vrot.slane %v426, %v433
    %436 = vset.pattern.permute.xlu0 0
    %437 = vperm.xlu0 %436, %v62
    %v438 = vpop.permute.xlu0 %437
    %v441 = vunpack.c.l.s4 839922192
    %v442 = vunpack.c.0.s8 %v441
    %v443 = vlaneseq
    %v444 = vshrl.u32 %v443, 7
    %v445 = vsub.s32 %v442, %v444
    %v446 = vrot.slane %v438, %v445
    %448 = vset.pattern.permute.xlu0 0
    %449 = vperm.xlu0 %448, %v63
    %v450 = vpop.permute.xlu0 %449
    %v453 = vunpack.c.l.s4 839922192
    %v454 = vunpack.c.0.s8 %v453
    %v455 = vlaneseq
    %v456 = vshrl.u32 %v455, 7
    %v457 = vsub.s32 %v454, %v456
    %v458 = vrot.slane %v450, %v457
    %460 = vset.pattern.permute.xlu0 0
    %461 = vperm.xlu0 %460, %v64
    %v462 = vpop.permute.xlu0 %461
    %v465 = vunpack.c.l.s4 839922192
    %v466 = vunpack.c.0.s8 %v465
    %v467 = vlaneseq
    %v468 = vshrl.u32 %v467, 7
    %v469 = vsub.s32 %v466, %v468
    %v470 = vrot.slane %v462, %v469
    %472 = vset.pattern.permute.xlu0 0
    %473 = vperm.xlu0 %472, %v65
    %v474 = vpop.permute.xlu0 %473
    %v477 = vunpack.c.l.s4 839922192
    %v478 = vunpack.c.0.s8 %v477
    %v479 = vlaneseq
    %v480 = vshrl.u32 %v479, 7
    %v481 = vsub.s32 %v478, %v480
    %v482 = vrot.slane %v474, %v481
    %v484 = vpack.i.b16 %v290, %v290
    %v486 = vlaneseq
    %v487 = vshrl.u32 %v486, 7
    %v488 = vsub.s32 0, %v487
    %v489 = vrot.slane %v484, %v488
    %v491 = vunpack.c.l.b16 %v489
    %v492 = vpack.c.b16 %v491, %v491
    %v494 = vmul.bf16 %v302, %v492
    %v495 = vmul.bf16 %v314, %v492
    %v496 = vmul.bf16 %v326, %v492
    %v497 = vmul.bf16 %v338, %v492
    %v498 = vmul.bf16 %v350, %v492
    %v499 = vmul.bf16 %v362, %v492
    %v500 = vmul.bf16 %v374, %v492
    %v501 = vmul.bf16 %v386, %v492
    %v502 = vmul.bf16 %v398, %v492
    %v503 = vmul.bf16 %v410, %v492
    %v504 = vmul.bf16 %v422, %v492
    %v505 = vmul.bf16 %v434, %v492
    %v506 = vmul.bf16 %v446, %v492
    %v507 = vmul.bf16 %v458, %v492
    %v508 = vmul.bf16 %v470, %v492
    %v509 = vmul.bf16 %v482, %v492
    %v510 = vadd.bf16 %v274, %v494
    %v511 = vadd.bf16 %v275, %v495
    %v512 = vadd.bf16 %v276, %v496
    %v513 = vadd.bf16 %v277, %v497
    %v514 = vadd.bf16 %v278, %v498
    %v515 = vadd.bf16 %v279, %v499
    %v516 = vadd.bf16 %v280, %v500
    %v517 = vadd.bf16 %v281, %v501
    %v518 = vadd.bf16 %v282, %v502
    %v519 = vadd.bf16 %v283, %v503
    %v520 = vadd.bf16 %v284, %v504
    %v521 = vadd.bf16 %v285, %v505
    %v522 = vadd.bf16 %v286, %v506
    %v523 = vadd.bf16 %v287, %v507
    %v524 = vadd.bf16 %v288, %v508
    %v525 = vadd.bf16 %v289, %v509
    %v526 = vld [vmem:[#allocation2] sm:$0xf]
    %v527 = vld [vmem:[#allocation2 + $0x4] sm:$0xf]
    %v528 = vld [vmem:[#allocation2 + $0x8] sm:$0xf]
    %v529 = vld [vmem:[#allocation2 + $0xc] sm:$0xf]
    %v530 = vld [vmem:[#allocation2 + $0x10] sm:$0xf]
    %v531 = vld [vmem:[#allocation2 + $0x14] sm:$0xf]
    %v532 = vld [vmem:[#allocation2 + $0x18] sm:$0xf]
    %v533 = vld [vmem:[#allocation2 + $0x1c] sm:$0xf]
    %v534 = vld [vmem:[#allocation2 + $0x20] sm:$0xf]
    %v535 = vld [vmem:[#allocation2 + $0x24] sm:$0xf]
    %v536 = vld [vmem:[#allocation2 + $0x28] sm:$0xf]
    %v537 = vld [vmem:[#allocation2 + $0x2c] sm:$0xf]
    %v538 = vld [vmem:[#allocation2 + $0x30] sm:$0xf]
    %v539 = vld [vmem:[#allocation2 + $0x34] sm:$0xf]
    %v540 = vld [vmem:[#allocation2 + $0x38] sm:$0xf]
    %v541 = vld [vmem:[#allocation2 + $0x3c] sm:$0xf]
    %v558 = vunpack.c.l.b16 %v510
    %v559 = vunpack.c.l.b16 %v511
    %v560 = vunpack.c.l.b16 %v512
    %v561 = vunpack.c.l.b16 %v513
    %v562 = vunpack.c.l.b16 %v514
    %v563 = vunpack.c.l.b16 %v515
    %v564 = vunpack.c.l.b16 %v516
    %v565 = vunpack.c.l.b16 %v517
    %v566 = vunpack.c.l.b16 %v518
    %v567 = vunpack.c.l.b16 %v519
    %v568 = vunpack.c.l.b16 %v520
    %v569 = vunpack.c.l.b16 %v521
    %v570 = vunpack.c.l.b16 %v522
    %v571 = vunpack.c.l.b16 %v523
    %v572 = vunpack.c.l.b16 %v524
    %v573 = vunpack.c.l.b16 %v525
    %v574 = vpack.c.b16 %v559, %v558
    %v575 = vpack.c.b16 %v561, %v560
    %v576 = vpack.c.b16 %v563, %v562
    %v577 = vpack.c.b16 %v565, %v564
    %v578 = vpack.c.b16 %v567, %v566
    %v579 = vpack.c.b16 %v569, %v568
    %v580 = vpack.c.b16 %v571, %v570
    %v581 = vpack.c.b16 %v573, %v572
    %v606 = vunpack.c.l.b16 %v526
    %v607 = vunpack.c.l.b16 %v527
    %v608 = vunpack.c.l.b16 %v528
    %v609 = vunpack.c.l.b16 %v529
    %v610 = vunpack.c.l.b16 %v530
    %v611 = vunpack.c.l.b16 %v531
    %v612 = vunpack.c.l.b16 %v532
    %v613 = vunpack.c.l.b16 %v533
    %v614 = vunpack.c.l.b16 %v534
    %v615 = vunpack.c.l.b16 %v535
    %v616 = vunpack.c.l.b16 %v536
    %v617 = vunpack.c.l.b16 %v537
    %v618 = vunpack.c.l.b16 %v538
    %v619 = vunpack.c.l.b16 %v539
    %v620 = vunpack.c.l.b16 %v540
    %v621 = vunpack.c.l.b16 %v541
    %v622 = vpack.c.b16 %v607, %v606
    %v623 = vpack.c.b16 %v609, %v608
    %v624 = vpack.c.b16 %v611, %v610
    %v625 = vpack.c.b16 %v613, %v612
    %v626 = vpack.c.b16 %v615, %v614
    %v627 = vpack.c.b16 %v617, %v616
    %v628 = vpack.c.b16 %v619, %v618
    %v629 = vpack.c.b16 %v621, %v620
    %638 = vmatprep.subr.bf16.mxu0 0
    %639 = vmatpush1.bf16.msra.mxu0 %v622
    %640 = vmatprep.subr.bf16.mxu0 0
    %641 = vmatpush1.bf16.msra.mxu0 %v623
    %642 = vmatprep.subr.bf16.mxu0 0
    %643 = vmatpush1.bf16.msra.mxu0 %v624
    %644 = vmatprep.subr.bf16.mxu0 0
    %645 = vmatpush1.bf16.msra.mxu0 %v625
    %646 = vmatprep.subr.bf16.mxu0 0
    %647 = vmatpush1.bf16.msra.mxu0 %v626
    %648 = vmatprep.subr.bf16.mxu0 0
    %649 = vmatpush1.bf16.msra.mxu0 %v627
    %650 = vmatprep.subr.bf16.mxu0 0
    %651 = vmatpush1.bf16.msra.mxu0 %v628
    %652 = vmatprep.subr.bf16.mxu0 0
    %653 = vmatpush1.bf16.msra.mxu0 %v629
    %654 = vmatprep.subr.bf16.mxu0 0
    %655 = vmatpush1.bf16.msra.mxu0 0
    %656 = vmatprep.subr.bf16.mxu0 0
    %657 = vmatpush1.bf16.msra.mxu0 0
    %658 = vmatprep.subr.bf16.mxu0 0
    %659 = vmatpush1.bf16.msra.mxu0 0
    %660 = vmatprep.subr.bf16.mxu0 0
    %661 = vmatpush1.bf16.msra.mxu0 0
    %662 = vmatprep.subr.bf16.mxu0 0
    %663 = vmatpush1.bf16.msra.mxu0 0
    %664 = vmatprep.subr.bf16.mxu0 0
    %665 = vmatpush1.bf16.msra.mxu0 0
    %666 = vmatprep.subr.bf16.mxu0 0
    %667 = vmatpush1.bf16.msra.mxu0 0
    %668 = vmatprep.subr.bf16.mxu0 0
    %669 = vmatpush1.bf16.msra.mxu0 0
    %670 = vmatprep.mubr.bf16.mxu0 0
    %671 = vmatmul.mubr.bf16.gmra.mrb[0].mxu0 %v574
    %v672 = vpop.f32.mrb[0].mxu0
    %v673 = vadd.f32 0.0, %v672
    %v674 = vpop.f32.mrb[0].mxu0
    %v675 = vpop.f32.mrb[0].mxu0
    %v676 = vadd.f32 0.0, %v675
    %v677 = vpop.f32.mrb[0].mxu0
    %678 = vmatprep.mubr.bf16.mxu0 0
    %679 = vmatmul.mubr.bf16.gmra.mrb[0].mxu0 %v575
    %v680 = vpop.f32.mrb[0].mxu0
    %v681 = vadd.f32 0.0, %v680
    %v682 = vpop.f32.mrb[0].mxu0
    %v683 = vpop.f32.mrb[0].mxu0
    %v684 = vadd.f32 0.0, %v683
    %v685 = vpop.f32.mrb[0].mxu0
    %686 = vmatprep.mubr.bf16.mxu0 0
    %687 = vmatmul.mubr.bf16.gmra.mrb[0].mxu0 %v576
    %v688 = vpop.f32.mrb[0].mxu0
    %v689 = vadd.f32 0.0, %v688
    %v690 = vpop.f32.mrb[0].mxu0
    %v691 = vpop.f32.mrb[0].mxu0
    %v692 = vadd.f32 0.0, %v691
    %v693 = vpop.f32.mrb[0].mxu0
    %694 = vmatprep.mubr.bf16.mxu0 0
    %695 = vmatmul.mubr.bf16.gmra.mrb[0].mxu0 %v577
    %v696 = vpop.f32.mrb[0].mxu0
    %v697 = vadd.f32 0.0, %v696
    %v698 = vpop.f32.mrb[0].mxu0
    %v699 = vpop.f32.mrb[0].mxu0
    %v700 = vadd.f32 0.0, %v699
    %v701 = vpop.f32.mrb[0].mxu0
    %702 = vmatprep.mubr.bf16.mxu0 0
    %703 = vmatmul.mubr.bf16.gmra.mrb[0].mxu0 %v578
    %v704 = vpop.f32.mrb[0].mxu0
    %v705 = vadd.f32 0.0, %v704
    %v706 = vpop.f32.mrb[0].mxu0
    %v707 = vpop.f32.mrb[0].mxu0
    %v708 = vadd.f32 0.0, %v707
    %v709 = vpop.f32.mrb[0].mxu0
    %710 = vmatprep.mubr.bf16.mxu0 0
    %711 = vmatmul.mubr.bf16.gmra.mrb[0].mxu0 %v579
    %v712 = vpop.f32.mrb[0].mxu0
    %v713 = vadd.f32 0.0, %v712
    %v714 = vpop.f32.mrb[0].mxu0
    %v715 = vpop.f32.mrb[0].mxu0
    %v716 = vadd.f32 0.0, %v715
    %v717 = vpop.f32.mrb[0].mxu0
    %718 = vmatprep.mubr.bf16.mxu0 0
    %719 = vmatmul.mubr.bf16.gmra.mrb[0].mxu0 %v580
    %v720 = vpop.f32.mrb[0].mxu0
    %v721 = vadd.f32 0.0, %v720
    %v722 = vpop.f32.mrb[0].mxu0
    %v723 = vpop.f32.mrb[0].mxu0
    %v724 = vadd.f32 0.0, %v723
    %v725 = vpop.f32.mrb[0].mxu0
    %726 = vmatprep.mubr.bf16.mxu0 0
    %727 = vmatmul.mubr.bf16.gmra.mrb[0].mxu0 %v581
    %v728 = vpop.f32.mrb[0].mxu0
    %v729 = vadd.f32 0.0, %v728
    %v730 = vpop.f32.mrb[0].mxu0
    %v731 = vpop.f32.mrb[0].mxu0
    %v732 = vadd.f32 0.0, %v731
    %v733 = vpop.f32.mrb[0].mxu0
    %734 = vdwg.mxu0
    %v735 = vpack.c.bf16 %v676, %v673
    %v736 = vpack.c.bf16 %v684, %v681
    %v737 = vpack.c.bf16 %v692, %v689
    %v738 = vpack.c.bf16 %v700, %v697
    %v739 = vpack.c.bf16 %v708, %v705
    %v740 = vpack.c.bf16 %v716, %v713
    %v741 = vpack.c.bf16 %v724, %v721
    %v742 = vpack.c.bf16 %v732, %v729
    %v751 = vunpack.c.l.b16 %v735
    %v752 = vunpack.c.h.b16 %v735
    %v753 = vunpack.c.l.b16 %v736
    %v754 = vunpack.c.h.b16 %v736
    %v755 = vunpack.c.l.b16 %v737
    %v756 = vunpack.c.h.b16 %v737
    %v757 = vunpack.c.l.b16 %v738
    %v758 = vunpack.c.h.b16 %v738
    %v759 = vunpack.c.l.b16 %v739
    %v760 = vunpack.c.h.b16 %v739
    %v761 = vunpack.c.l.b16 %v740
    %v762 = vunpack.c.h.b16 %v740
    %v763 = vunpack.c.l.b16 %v741
    %v764 = vunpack.c.h.b16 %v741
    %v765 = vunpack.c.l.b16 %v742
    %v766 = vunpack.c.h.b16 %v742
    %v767 = vpack.c.b16 %v751, %v751
    %v768 = vpack.c.b16 %v752, %v752
    %v769 = vpack.c.b16 %v753, %v753
    %v770 = vpack.c.b16 %v754, %v754
    %v771 = vpack.c.b16 %v755, %v755
    %v772 = vpack.c.b16 %v756, %v756
    %v773 = vpack.c.b16 %v757, %v757
    %v774 = vpack.c.b16 %v758, %v758
    %v775 = vpack.c.b16 %v759, %v759
    %v776 = vpack.c.b16 %v760, %v760
    %v777 = vpack.c.b16 %v761, %v761
    %v778 = vpack.c.b16 %v762, %v762
    %v779 = vpack.c.b16 %v763, %v763
    %v780 = vpack.c.b16 %v764, %v764
    %v781 = vpack.c.b16 %v765, %v765
    %v782 = vpack.c.b16 %v766, %v766
    %799 = vst [vmem:[#allocation5] sm:$0xf] %v767
    %800 = vst [vmem:[#allocation5 + $0x4] sm:$0xf] %v768
    %801 = vst [vmem:[#allocation5 + $0x8] sm:$0xf] %v769
    %802 = vst [vmem:[#allocation5 + $0xc] sm:$0xf] %v770
    %803 = vst [vmem:[#allocation5 + $0x10] sm:$0xf] %v771
    %804 = vst [vmem:[#allocation5 + $0x14] sm:$0xf] %v772
    %805 = vst [vmem:[#allocation5 + $0x18] sm:$0xf] %v773
    %806 = vst [vmem:[#allocation5 + $0x1c] sm:$0xf] %v774
    %807 = vst [vmem:[#allocation5 + $0x20] sm:$0xf] %v775
    %808 = vst [vmem:[#allocation5 + $0x24] sm:$0xf] %v776
    %809 = vst [vmem:[#allocation5 + $0x28] sm:$0xf] %v777
    %810 = vst [vmem:[#allocation5 + $0x2c] sm:$0xf] %v778
    %811 = vst [vmem:[#allocation5 + $0x30] sm:$0xf] %v779
    %812 = vst [vmem:[#allocation5 + $0x34] sm:$0xf] %v780
    %813 = vst [vmem:[#allocation5 + $0x38] sm:$0xf] %v781
    %814 = vst [vmem:[#allocation5 + $0x3c] sm:$0xf] %v782
    // Predicated region
    $region22: #{tpu_custom_call.1} parent=1 // pred_check
      _
    $region23: #{tpu_custom_call.1} parent=1 // pred_check_branch
      %816 = sbr.rel (0) target = $region25
    $region24: #{tpu_custom_call.1} parent=1 // pred_region
      %s818 = ssub.s32 1024, 1024
      %819 = vsyncadd [#allocation4], %s818
      %s820 = sshll.u32 [#allocation5], 4
      %s821 = int_to_ptr.vmem [resolvable:$true] %s820
      %826 = dma.vmem_to_hbm [thread:$0]  %s821, 1024, %s4, [#allocation4], 64, 64, 4
    $region25: #{tpu_custom_call.1} parent=1 // pred_fallthru
      _
    // Predicated region
    $region26: #{tpu_custom_call.1} parent=1 // pred_check
      _
    $region27: #{tpu_custom_call.1} parent=1 // pred_check_branch
      %828 = sbr.rel (0) target = $region29
    $region28: #{tpu_custom_call.1} parent=1 // pred_region
      %829 = dma.done [#allocation4], 1024
    $region29: #{tpu_custom_call.1} parent=1 // pred_fallthru
      _
    %830 = vsyncpa [#allocation3], 1
    %831 = vsyncpa [#allocation4], 1

</llo_original>
